<compile_context>
chip_gen: v7x
topology: tpu7x:2x2x1
jax: 0.10.0
libtpu: 0.0.40
codegen_flags: <defaults>
</compile_context>

<pallas_src>
import jax
import jax.numpy as jnp
from jax.experimental import pallas as pl
from jax.experimental.pallas import tpu as pltpu


# --------------------------------------------------------------------------
# Tile helper: full extent if small, otherwise a multiple-of-128 divisor.
# (BlockSpec last-two dims must be (8,128)-divisible or span the full array.)
# --------------------------------------------------------------------------
def _pick_tile(dim, max_tile=128):
    if dim <= max_tile:
        return dim
    t = (max_tile // 128) * 128
    while t >= 128:
        if dim % t == 0:
            return t
        t -= 128
    return dim


# --------------------------------------------------------------------------
# Stage 1: projection GEMM, batch folded into M so the MXU sees a real matmul.
# --------------------------------------------------------------------------
def _proj_kernel(x_ref, w_ref, o_ref):
    o_ref[...] = jnp.dot(x_ref[...], w_ref[...],
                         preferred_element_type=jnp.float32).astype(o_ref.dtype)


def _project(x2d, w):
    M, D = x2d.shape
    H = w.shape[1]
    tm = _pick_tile(M, 256)
    return pl.pallas_call(
        _proj_kernel,
        out_shape=jax.ShapeDtypeStruct((M, H), jnp.float32),
        grid_spec=pltpu.PrefetchScalarGridSpec(
            num_scalar_prefetch=0,
            grid=(M // tm,),
            in_specs=[
                pl.BlockSpec((tm, D), lambda i: (i, 0)),
                pl.BlockSpec((D, H), lambda i: (0, 0)),
            ],
            out_specs=pl.BlockSpec((tm, H), lambda i: (i, 0)),
        ),
        compiler_params=pltpu.CompilerParams(
            dimension_semantics=("parallel",)),
    )(x2d, w)


# --------------------------------------------------------------------------
# Stage 2: flash-style additive attention with online softmax over the Lk axis.
# --------------------------------------------------------------------------
def _attn_kernel(qpt_ref, kpt_ref, kp_ref, vcol_ref,
                 out_ref, u_ref,
                 m_sc, l_sc, acc_sc):
    # Per-grid-step refs:
    #   qpt_ref : (1, H, tq)   (q-projection, transposed)
    #   kpt_ref : (1, H, tk)   (k-projection, transposed)
    #   kp_ref  : (1, tk, H)   (k-projection, natural layout for attn @ kp)
    #   vcol_ref: (H, 1)
    #   out_ref : (1, tq, H)   resident across the ki axis (accumulator output)
    #   u_ref   : (1, tq, tk)  pre-softmax scores
    ki = pl.program_id(2)

    @pl.when(ki == 0)
    def _():
        m_sc[...] = jnp.full_like(m_sc, -jnp.inf)
        l_sc[...] = jnp.zeros_like(l_sc)
        acc_sc[...] = jnp.zeros_like(acc_sc)

    qpt = qpt_ref[0]          # (H, tq) f32
    kpt = kpt_ref[0]          # (H, tk) f32
    kp = kp_ref[0]            # (tk, H) f32
    vcol = vcol_ref[...]      # (H, 1)  f32

    # Score tile in (H, tq, tk) layout: lanes carry tk, the H reduction runs
    # over the leading axis (pure VPU adds, no XLU cross-lane reduce).
    t = jnp.tanh(qpt[:, :, None] + kpt[:, None, :])       # (H, tq, tk)
    s = jnp.sum(t * vcol[:, :, None], axis=0)             # (tq, tk)

    u_ref[0] = s.astype(u_ref.dtype)

    # Online softmax over the key axis.
    m_prev = m_sc[...]                                     # (tq, 1)
    m_new = jnp.maximum(m_prev, jnp.max(s, axis=-1, keepdims=True))
    alpha = jnp.exp(m_prev - m_new)
    p = jnp.exp(s - m_new)                                 # (tq, tk)
    l_sc[...] = alpha * l_sc[...] + jnp.sum(p, axis=-1, keepdims=True)
    acc_sc[...] = alpha * acc_sc[...] + jnp.dot(
        p, kp, preferred_element_type=jnp.float32)         # (tq, H)
    m_sc[...] = m_new

    @pl.when(ki == pl.num_programs(2) - 1)
    def _():
        out_ref[0] = (acc_sc[...] *
                      pl.reciprocal(l_sc[...], approx=True)).astype(out_ref.dtype)


def additive_attention(q, k, wq_t, wk_t, v_row, *, tq=None, tk=None):
    """q: (B,Lq,Dq), k: (B,Lk,Dk), wq_t: (Dq,H), wk_t: (Dk,H), v_row: (1,H)."""
    B, Lq, Dq = q.shape
    _, Lk, Dk = k.shape
    H = wq_t.shape[1]

    # ---- Stage 1: projections (batch folded into M) ----------------------
    qp = _project(q.reshape(B * Lq, Dq), wq_t).reshape(B, Lq, H)
    kp = _project(k.reshape(B * Lk, Dk), wk_t).reshape(B, Lk, H)

    # Layout plumbing (wrapper-side transpose is not compute hoisting): the
    # transposed copies let the kernel reduce over H on a non-lane axis
    # without any in-kernel XLU transposes.
    qp_t = jnp.transpose(qp, (0, 2, 1))                    # (B, H, Lq)
    kp_t = jnp.transpose(kp, (0, 2, 1))                    # (B, H, Lk)
    v_col = v_row.reshape(H, 1)

    tq = tq or _pick_tile(Lq, 128)
    tk = tk or _pick_tile(Lk, 128)
    grid = (B, Lq // tq, Lk // tk)

    out_shapes = (
        jax.ShapeDtypeStruct((B, Lq, H), jnp.float32),     # out
        jax.ShapeDtypeStruct((B, Lq, Lk), jnp.float32),    # u (pre-softmax)
    )
    cost = pl.CostEstimate(
        flops=int(4 * B * Lq * Lk * H + 2 * B * Lq * Lk * H),
        transcendentals=int(B * Lq * Lk * H),              # the tanh stream
        bytes_accessed=int(4 * (2 * B * Lq * H + 2 * B * Lk * H
                                + B * Lq * Lk + B * Lq * H + H)),
    )

    return pl.pallas_call(
        _attn_kernel,
        out_shape=out_shapes,
        grid_spec=pltpu.PrefetchScalarGridSpec(
            num_scalar_prefetch=0,
            grid=grid,
            in_specs=[
                pl.BlockSpec((1, H, tq), lambda b, qi, ki: (b, 0, qi)),
                pl.BlockSpec((1, H, tk), lambda b, qi, ki: (b, 0, ki)),
                pl.BlockSpec((1, tk, H), lambda b, qi, ki: (b, ki, 0)),
                pl.BlockSpec((H, 1), lambda b, qi, ki: (0, 0)),
            ],
            out_specs=[
                # out is resident across the ki (reduction) axis.
                pl.BlockSpec((1, tq, H), lambda b, qi, ki: (b, qi, 0)),
                pl.BlockSpec((1, tq, tk), lambda b, qi, ki: (b, qi, ki)),
            ],
            scratch_shapes=[
                pltpu.VMEM((tq, 1), jnp.float32),   # running max m
                pltpu.VMEM((tq, 1), jnp.float32),   # running denom l
                pltpu.VMEM((tq, H), jnp.float32),   # output accumulator
            ],
        ),
        compiler_params=pltpu.CompilerParams(
            dimension_semantics=("parallel", "parallel", "arbitrary"),
            vmem_limit_bytes=32 * 1024 * 1024,
        ),
        cost_estimate=cost,
    )(qp_t, kp_t, kp, v_col)


# --------------------------------------------------------------------------
# Pure-JAX reference.
# --------------------------------------------------------------------------
def reference(q, k, wq_t, wk_t, v_row):
    qp = jnp.einsum('bqd,dh->bqh', q, wq_t)
    kp = jnp.einsum('bkd,dh->bkh', k, wk_t)
    u = jnp.sum(jnp.tanh(qp[:, :, None, :] + kp[:, None, :, :])
                * v_row[None, None, :, :], axis=-1)
    attn = jax.nn.softmax(u, axis=-1)
    out = jnp.einsum('bql,blh->bqh', attn, kp)
    return out, u


if __name__ == "__main__":
    # Small shapes consistent with the module: lstm_hidden_units = 32.
    B, Lq, Lk = 2, 8, 16
    Dq = Dk = H = 32   # q_dim = k_dim = hidden_dim = lstm_hidden_units

    key = jax.random.PRNGKey(0)
    kq, kk, kwq, kwk, kv = jax.random.split(key, 5)

    q = jax.random.normal(kq, (B, Lq, Dq), dtype=jnp.float32)
    k = jax.random.normal(kk, (B, Lk, Dk), dtype=jnp.float32)

    # "Linear(bias=False)" weights, stored pre-transposed as (Din, H).
    wq_t = jax.random.normal(kwq, (Dq, H), dtype=jnp.float32) * (1.0 / jnp.sqrt(Dq))
    wk_t = jax.random.normal(kwk, (Dk, H), dtype=jnp.float32) * (1.0 / jnp.sqrt(Dk))
    v_row = jax.random.normal(kv, (1, H), dtype=jnp.float32) * (1.0 / jnp.sqrt(H))

    out, u = additive_attention(q, k, wq_t, wk_t, v_row)
    jax.block_until_ready((out, u))

    out_ref, u_ref = reference(q, k, wq_t, wk_t, v_row)
    # u is pre-softmax and untouched by the approx reciprocal -> tight check.
    assert jnp.allclose(u, u_ref, rtol=1e-4, atol=1e-5), "u mismatch"
    # out uses pl.reciprocal(approx=True) -> allow ~1e-3-level perturbation.
    assert jnp.allclose(out, out_ref, rtol=3e-3, atol=1e-3), "out mismatch"

    print("KERNEL_OK")
</pallas_src>

<mosaic_0001>
module attributes {stable_mosaic.version = 11 : i64} {
  func.func @_proj_kernel(%arg0: i32, %arg1: memref<16x32xf32, #tpu.memory_space<vmem>>, %arg2: memref<32x32xf32, #tpu.memory_space<vmem>>, %arg3: memref<16x32xf32, #tpu.memory_space<vmem>>) attributes {dimension_semantics = [#tpu.dimension_semantics<parallel>], iteration_bounds = array<i64: 1>, scalar_prefetch = 0 : i64, scratch_operands = 0 : i64, tpu.core_type = #tpu.core_type<tc>, window_params = [{transform_indices = @transform_0, window_bounds = array<i64: 16, 32>}, {pipeline_mode = #tpu.pipeline_mode<synchronous>, transform_indices = @transform_1, window_bounds = array<i64: 32, 32>}, {transform_indices = @transform_2, window_bounds = array<i64: 16, 32>}]} {
    %c0 = arith.constant 0 : index
    %c0_0 = arith.constant 0 : index
    %0 = vector.load %arg1[%c0, %c0_0] : memref<16x32xf32, #tpu.memory_space<vmem>>, vector<16x32xf32>
    %c0_1 = arith.constant 0 : index
    %c0_2 = arith.constant 0 : index
    %1 = vector.load %arg2[%c0_1, %c0_2] : memref<32x32xf32, #tpu.memory_space<vmem>>, vector<32x32xf32>
    %cst = arith.constant dense<0.000000e+00> : vector<16x32xf32>
    %2 = tpu.matmul %0, %1, %cst {dimension_numbers = #tpu.dot_dimension_numbers<[1], [0], [0], [1], [0, 0, 1, 1], [], []>} : vector<16x32xf32>, vector<32x32xf32>, vector<16x32xf32> -> vector<16x32xf32>
    %c0_3 = arith.constant 0 : index
    %c0_4 = arith.constant 0 : index
    %3 = vector.load %arg3[%c0_3, %c0_4] : memref<16x32xf32, #tpu.memory_space<vmem>>, vector<16x32xf32>
    tpu.vector_store %arg3[%c0_3, %c0_4], %2 {strides = array<i32>} : memref<16x32xf32, #tpu.memory_space<vmem>>, vector<16x32xf32>,
    return
  }
  func.func @transform_0(%arg0: i32) -> (i32, i32) {
    %c0_i32 = arith.constant 0 : i32
    %c0_i32_0 = arith.constant 0 : i32
    return %arg0, %c0_i32 : i32, i32
  }
  func.func @transform_1(%arg0: i32) -> (i32, i32) {
    %c0_i32 = arith.constant 0 : i32
    %c0_i32_0 = arith.constant 0 : i32
    %c0_i32_1 = arith.constant 0 : i32
    return %c0_i32, %c0_i32_0 : i32, i32
  }
  func.func @transform_2(%arg0: i32) -> (i32, i32) {
    %c0_i32 = arith.constant 0 : i32
    %c0_i32_0 = arith.constant 0 : i32
    return %arg0, %c0_i32 : i32, i32
  }
}

</mosaic_0001>

<llo_original>
// kernel: tpu_custom_call.1
$region0: #{tpu_custom_call.1}
  #allocation0 [shape = 'u32[]', space=smem, size = 0x4, offset = 0x4, fixed_abs, tag = 'smem constant byte address 0x4 - core index']
  #allocation1 [shape = 'u32[144,128]{1,0:T(1,128)}', space=vmem, size = 0x12000, scoped, tag = 'internal scratch']
  %s0 = inlined_call_operand.hbm [shape: f32[16,32], index: 0, kind: input, shape index: {}]
  %s1 = inlined_call_operand.hbm [shape: f32[32,32], index: 1, kind: input, shape index: {}]
  %s2 = inlined_call_operand.hbm [shape: f32[16,32], index: 2, kind: output, shape index: {}]
  %s3 = sld [smem:[#allocation0]]
  $region26: #{tpu_custom_call.1} parent=0
    _
  %s5 = ssub.s32 1, %s3
  %s6 = scalar_select 0, %s5, %s3
  $region1: #{tpu_custom_call.1} parent=0
    #allocation2 [shape = 'u8[8192]{0}', space=vmem, size = 0x2000, scoped, tag = 'input window, operand 0, single buffered']
    #allocation3 [shape = 's32[1]{0}', space=sflag, size = 0x4, scoped, tag = 'scoped memory for tpu_custom_call.1']
    #allocation4 [shape = 's32[1]{0}', space=sflag, size = 0x4, scoped, tag = 'scoped memory for tpu_custom_call.1']
    #allocation5 [shape = 'u8[16384]{0}', space=vmem, size = 0x4000, scoped, tag = 'input window, operand 1, single buffered']
    #allocation6 [shape = 's32[1]{0}', space=sflag, size = 0x4, scoped, tag = 'scoped memory for tpu_custom_call.1']
    #allocation7 [shape = 'u8[8192]{0}', space=vmem, size = 0x2000, scoped, tag = 'output window, operand 0, single buffered']
    %7 = vsyncpa [#allocation3], 0
    %8 = vsyncpa [#allocation6], 0
    %9 = vsyncpa [#allocation4], 0
    // Predicated region
    $region2: #{tpu_custom_call.1} parent=1 // pred_check
      _
    $region3: #{tpu_custom_call.1} parent=1 // pred_check_branch
      %11 = sbr.rel (0) target = $region5
    $region4: #{tpu_custom_call.1} parent=1 // pred_region
      %s13 = ssub.s32 256, 256
      %14 = vsyncadd [#allocation3], %s13
      %s15 = sshll.u32 [#allocation2], 4
      %s16 = int_to_ptr.vmem [resolvable:$true] %s15
      %21 = dma.hbm_to_vmem [thread:$0]  %s0, 256, %s16, [#allocation3], 128, 128, 8
    $region5: #{tpu_custom_call.1} parent=1 // pred_fallthru
      _
    // Predicated region
    $region6: #{tpu_custom_call.1} parent=1 // pred_check
      _
    $region7: #{tpu_custom_call.1} parent=1 // pred_check_branch
      %23 = sbr.rel (0) target = $region9
    $region8: #{tpu_custom_call.1} parent=1 // pred_region
      %s25 = ssub.s32 512, 512
      %26 = vsyncadd [#allocation6], %s25
      %s27 = sshll.u32 [#allocation5], 4
      %s28 = int_to_ptr.vmem [resolvable:$true] %s27
      %33 = dma.hbm_to_vmem [thread:$0]  %s1, 512, %s28, [#allocation6], 128, 128, 8
    $region9: #{tpu_custom_call.1} parent=1 // pred_fallthru
      _
    // Predicated region
    $region10: #{tpu_custom_call.1} parent=1 // pred_check
      _
    $region11: #{tpu_custom_call.1} parent=1 // pred_check_branch
      %35 = sbr.rel (0) target = $region13
    $region12: #{tpu_custom_call.1} parent=1 // pred_region
      %36 = dma.done [#allocation3], 256
    $region13: #{tpu_custom_call.1} parent=1 // pred_fallthru
      _
    // Predicated region
    $region14: #{tpu_custom_call.1} parent=1 // pred_check
      _
    $region15: #{tpu_custom_call.1} parent=1 // pred_check_branch
      %38 = sbr.rel (0) target = $region17
    $region16: #{tpu_custom_call.1} parent=1 // pred_region
      %39 = dma.done [#allocation6], 512
    $region17: #{tpu_custom_call.1} parent=1 // pred_fallthru
      _
    %v40 = vld [vmem:[#allocation2] sm:$0xff]
    %v41 = vld [vmem:[#allocation2 + $0x8] sm:$0xff]
    %v42 = vld [vmem:[#allocation5] sm:$0xff]
    %v43 = vld [vmem:[#allocation5 + $0x8] sm:$0xff]
    %v44 = vld [vmem:[#allocation5 + $0x10] sm:$0xff]
    %v45 = vld [vmem:[#allocation5 + $0x18] sm:$0xff]
    %vm46 = vcmask 261120
    %v48 = vsel %vm46, %v40, 0
    %v51 = vsel %vm46, %v41, 0
    %53 = vmatprep.subr.mxu0 0.0
    %54 = vmatpush1.msra.mxu0 %v42
    %55 = vmatprep.subr.mxu0 0.0
    %56 = vmatpush1.msra.mxu0 %v43
    %57 = vmatprep.subr.mxu0 0.0
    %58 = vmatpush1.msra.mxu0 %v44
    %59 = vmatprep.subr.mxu0 0.0
    %60 = vmatpush1.msra.mxu0 %v45
    %61 = vmatprep.subr.mxu0 0.0
    %62 = vmatpush1.msra.mxu0 0.0
    %63 = vmatprep.subr.mxu0 0.0
    %64 = vmatpush1.msra.mxu0 0.0
    %65 = vmatprep.subr.mxu0 0.0
    %66 = vmatpush1.msra.mxu0 0.0
    %67 = vmatprep.subr.mxu0 0.0
    %68 = vmatpush1.msra.mxu0 0.0
    %69 = vmatprep.subr.mxu0 0.0
    %70 = vmatpush1.msra.mxu0 0.0
    %71 = vmatprep.subr.mxu0 0.0
    %72 = vmatpush1.msra.mxu0 0.0
    %73 = vmatprep.subr.mxu0 0.0
    %74 = vmatpush1.msra.mxu0 0.0
    %75 = vmatprep.subr.mxu0 0.0
    %76 = vmatpush1.msra.mxu0 0.0
    %77 = vmatprep.subr.mxu0 0.0
    %78 = vmatpush1.msra.mxu0 0.0
    %79 = vmatprep.subr.mxu0 0.0
    %80 = vmatpush1.msra.mxu0 0.0
    %81 = vmatprep.subr.mxu0 0.0
    %82 = vmatpush1.msra.mxu0 0.0
    %83 = vmatprep.subr.mxu0 0.0
    %84 = vmatpush1.msra.mxu0 0.0
    %85 = vmatprep.subr.mxu0 0.0
    %86 = vmatpush1.msra.mxu0 0.0
    %87 = vmatprep.subr.mxu0 0.0
    %88 = vmatpush1.msra.mxu0 0.0
    %89 = vmatprep.subr.mxu0 0.0
    %90 = vmatpush1.msra.mxu0 0.0
    %91 = vmatprep.subr.mxu0 0.0
    %92 = vmatpush1.msra.mxu0 0.0
    %93 = vmatprep.subr.mxu0 0.0
    %94 = vmatpush1.msra.mxu0 0.0
    %95 = vmatprep.subr.mxu0 0.0
    %96 = vmatpush1.msra.mxu0 0.0
    %97 = vmatprep.subr.mxu0 0.0
    %98 = vmatpush1.msra.mxu0 0.0
    %99 = vmatprep.subr.mxu0 0.0
    %100 = vmatpush1.msra.mxu0 0.0
    %101 = vmatprep.subr.mxu0 0.0
    %102 = vmatpush1.msra.mxu0 0.0
    %103 = vmatprep.subr.mxu0 0.0
    %104 = vmatpush1.msra.mxu0 0.0
    %105 = vmatprep.subr.mxu0 0.0
    %106 = vmatpush1.msra.mxu0 0.0
    %107 = vmatprep.subr.mxu0 0.0
    %108 = vmatpush1.msra.mxu0 0.0
    %109 = vmatprep.subr.mxu0 0.0
    %110 = vmatpush1.msra.mxu0 0.0
    %111 = vmatprep.subr.mxu0 0.0
    %112 = vmatpush1.msra.mxu0 0.0
    %113 = vmatprep.subr.mxu0 0.0
    %114 = vmatpush1.msra.mxu0 0.0
    %115 = vmatprep.subr.mxu0 0.0
    %116 = vmatpush1.msra.mxu0 0.0
    %117 = vmatprep.mubr.f32.mxu0 0.0
    %118 = vmatmul.mubr.f32.gmra.mrb[0].mxu0 %v48
    %v119 = vpop.f32.mrb[0].mxu0
    %v120 = vadd.f32 0.0, %v119
    %v121 = vpop.f32.mrb[0].mxu0
    %122 = vmatprep.mubr.f32.mxu0 0.0
    %123 = vmatmul.mubr.f32.gmra.mrb[0].mxu0 %v51
    %v124 = vpop.f32.mrb[0].mxu0
    %v125 = vadd.f32 0.0, %v124
    %v126 = vpop.f32.mrb[0].mxu0
    %127 = vdwg.mxu0
    %128 = vst.msk [vmem:[#allocation7] sm:$0xff] %vm46, %v120
    %129 = vst.msk [vmem:[#allocation7 + $0x8] sm:$0xff] %vm46, %v125
    // Predicated region
    $region18: #{tpu_custom_call.1} parent=1 // pred_check
      _
    $region19: #{tpu_custom_call.1} parent=1 // pred_check_branch
      %131 = sbr.rel (0) target = $region21
    $region20: #{tpu_custom_call.1} parent=1 // pred_region
      %s133 = ssub.s32 256, 256
      %134 = vsyncadd [#allocation4], %s133
      %s135 = sshll.u32 [#allocation7], 4
      %s136 = int_to_ptr.vmem [resolvable:$true] %s135
      %141 = dma.vmem_to_hbm [thread:$0]  %s136, 256, %s2, [#allocation4], 128, 128, 8
    $region21: #{tpu_custom_call.1} parent=1 // pred_fallthru
      _
    // Predicated region
    $region22: #{tpu_custom_call.1} parent=1 // pred_check
      _
    $region23: #{tpu_custom_call.1} parent=1 // pred_check_branch
      %143 = sbr.rel (0) target = $region25
    $region24: #{tpu_custom_call.1} parent=1 // pred_region
      %144 = dma.done [#allocation4], 256
    $region25: #{tpu_custom_call.1} parent=1 // pred_fallthru
      _
    %145 = vsyncpa [#allocation3], 1
    %146 = vsyncpa [#allocation6], 1
    %147 = vsyncpa [#allocation4], 1

</llo_original>
